<compile_context>
chip_gen: v5e
topology: v5e:2x2
jax: 0.10.0
libtpu: 0.0.40
codegen_flags: <defaults>
</compile_context>

<pallas_src>
import functools

import jax
import jax.numpy as jnp
from jax.experimental import pallas as pl
from jax.experimental.pallas import tpu as pltpu


def _round_up(x, m):
    return (x + m - 1) // m * m


def _fused_mlp_kernel(x_ref, *refs, num_layers):
    """refs = (w0, b0, w1, b1, ..., w_{L-1}, b_{L-1}, o_ref).

    x_ref: (TILE_N, D0_pad) bf16
    w_i  : (Din_pad, Dout_pad) bf16, b_i: (1, Dout_pad) f32
    o_ref: (TILE_N, Dlast_pad) f32
    """
    o_ref = refs[-1]
    wb = refs[:-1]

    h = x_ref[...]  # bf16
    y = None
    for i in range(num_layers):
        w = wb[2 * i][...]
        b = wb[2 * i + 1][...]
        # MXU in bf16, accumulate f32; epilogue (bias, ReLU) in f32.
        y = jnp.dot(h, w, preferred_element_type=jnp.float32) + b
        if i < num_layers - 1:
            y = jnp.maximum(y, 0.0)
            # Dropout(0.2): identity in eval mode.
            h = y.astype(jnp.bfloat16)
    o_ref[...] = y.astype(o_ref.dtype)


def init_mlp_params(key, input_dims, n_hiddens, n_class):
    """Deterministic init mirroring nn.Linear defaults:
    U(-1/sqrt(fan_in), 1/sqrt(fan_in)) for both weight and bias.
    Weights stored as (D_in, D_out) (transposed vs. PyTorch) so the kernel
    computes y = x @ W + b (== x @ W_pt.T + b)."""
    if isinstance(n_hiddens, int):
        n_hiddens = [n_hiddens]
    dims = [input_dims] + list(n_hiddens) + [n_class]
    params = []
    for d_in, d_out in zip(dims[:-1], dims[1:]):
        key, kw, kb = jax.random.split(key, 3)
        bound = 1.0 / (d_in ** 0.5)
        w = jax.random.uniform(kw, (d_in, d_out), jnp.float32, -bound, bound)
        b = jax.random.uniform(kb, (d_out,), jnp.float32, -bound, bound)
        params.append((w, b))
    return params


@jax.jit
def mlp_forward(x_nchw, params):
    # Flatten: (N, C, H, W) -> (N, C*H*W), same as inpt.view(inpt.size(0), -1)
    n = x_nchw.shape[0]
    x = x_nchw.reshape(n, -1).astype(jnp.float32)

    num_layers = len(params)
    dims = [x.shape[1]] + [w.shape[1] for (w, _) in params]
    dims_pad = [_round_up(d, 128) for d in dims]  # lane-align every feature dim

    # Batch tiling: pad to a multiple of 8 sublanes, tile up to 256 rows.
    n_pad8 = _round_up(n, 8)
    tile_n = min(256, n_pad8)
    n_pad = _round_up(n, tile_n)
    grid = (n_pad // tile_n,)

    # Pad + cast input activations (bf16 into the MXU).
    x_p = jnp.pad(x, ((0, n_pad - n), (0, dims_pad[0] - dims[0])))
    x_p = x_p.astype(jnp.bfloat16)

    # Pad weights/biases; weights in bf16, biases in f32.
    packed = []
    in_specs = [pl.BlockSpec((tile_n, dims_pad[0]), lambda i: (i, 0))]
    for li, (w, b) in enumerate(params):
        d_in, d_out = w.shape
        d_in_p, d_out_p = dims_pad[li], dims_pad[li + 1]
        w_p = jnp.pad(w, ((0, d_in_p - d_in), (0, d_out_p - d_out)))
        b_p = jnp.pad(b, (0, d_out_p - d_out)).reshape(1, d_out_p)
        packed.append(w_p.astype(jnp.bfloat16))
        packed.append(b_p.astype(jnp.float32))
        # Same block index every grid step -> weights/biases stay VMEM-resident.
        in_specs.append(pl.BlockSpec((d_in_p, d_out_p), lambda i: (0, 0)))
        in_specs.append(pl.BlockSpec((1, d_out_p), lambda i: (0, 0)))

    out_spec = pl.BlockSpec((tile_n, dims_pad[-1]), lambda i: (i, 0))
    kernel = functools.partial(_fused_mlp_kernel, num_layers=num_layers)

    out_p = pl.pallas_call(
        kernel,
        out_shape=jax.ShapeDtypeStruct((n_pad, dims_pad[-1]), jnp.float32),
        grid=grid,
        in_specs=in_specs,
        out_specs=out_spec,
        compiler_params=pltpu.CompilerParams(
            dimension_semantics=("parallel",),  # shard batch tiles across TCs (v7x)
        ),
    )(x_p, *packed)

    # Strip batch and class padding outside the kernel.
    return out_p[:n, : dims[-1]]


if __name__ == "__main__":
    # Small MNIST-like shapes: batch=2, 1x16x16 image -> input_dims=256,
    # two hidden layers of 32, 10 classes.
    batch, c, h, w = 2, 1, 16, 16
    input_dims = c * h * w
    n_hiddens = [32, 32]
    n_class = 10

    key = jax.random.PRNGKey(0)
    k_x, k_p = jax.random.split(key)
    x = jax.random.normal(k_x, (batch, c, h, w), jnp.float32)
    params = init_mlp_params(k_p, input_dims, n_hiddens, n_class)

    out = mlp_forward(x, params)
    jax.block_until_ready(out)
    assert out.shape == (batch, n_class), out.shape
    assert out.dtype == jnp.float32
    assert bool(jnp.all(jnp.isfinite(out)))
    print("KERNEL_OK")
</pallas_src>

<mosaic_0001>
module attributes {stable_mosaic.version = 11 : i64} {
  func.func @_fused_mlp_kernel(%arg0: i32, %arg1: memref<8x256xbf16, #tpu.memory_space<vmem>>, %arg2: memref<256x128xbf16, #tpu.memory_space<vmem>>, %arg3: memref<1x128xf32, #tpu.memory_space<vmem>>, %arg4: memref<128x128xbf16, #tpu.memory_space<vmem>>, %arg5: memref<1x128xf32, #tpu.memory_space<vmem>>, %arg6: memref<128x128xbf16, #tpu.memory_space<vmem>>, %arg7: memref<1x128xf32, #tpu.memory_space<vmem>>, %arg8: memref<8x128xf32, #tpu.memory_space<vmem>>) attributes {dimension_semantics = [#tpu.dimension_semantics<parallel>], iteration_bounds = array<i64: 1>, scalar_prefetch = 0 : i64, scratch_operands = 0 : i64, tpu.core_type = #tpu.core_type<tc>, window_params = [{transform_indices = @transform_0, window_bounds = array<i64: 8, 256>}, {pipeline_mode = #tpu.pipeline_mode<synchronous>, transform_indices = @transform_1, window_bounds = array<i64: 256, 128>}, {pipeline_mode = #tpu.pipeline_mode<synchronous>, transform_indices = @transform_2, window_bounds = array<i64: 1, 128>}, {pipeline_mode = #tpu.pipeline_mode<synchronous>, transform_indices = @transform_3, window_bounds = array<i64: 128, 128>}, {pipeline_mode = #tpu.pipeline_mode<synchronous>, transform_indices = @transform_4, window_bounds = array<i64: 1, 128>}, {pipeline_mode = #tpu.pipeline_mode<synchronous>, transform_indices = @transform_5, window_bounds = array<i64: 128, 128>}, {pipeline_mode = #tpu.pipeline_mode<synchronous>, transform_indices = @transform_6, window_bounds = array<i64: 1, 128>}, {transform_indices = @transform_7, window_bounds = array<i64: 8, 128>}]} {
    %c0 = arith.constant 0 : index
    %c0_0 = arith.constant 0 : index
    %0 = vector.load %arg1[%c0, %c0_0] : memref<8x256xbf16, #tpu.memory_space<vmem>>, vector<8x256xbf16>
    %c0_1 = arith.constant 0 : index
    %c0_2 = arith.constant 0 : index
    %1 = vector.load %arg2[%c0_1, %c0_2] : memref<256x128xbf16, #tpu.memory_space<vmem>>, vector<256x128xbf16>
    %c0_3 = arith.constant 0 : index
    %c0_4 = arith.constant 0 : index
    %2 = vector.load %arg3[%c0_3, %c0_4] : memref<1x128xf32, #tpu.memory_space<vmem>>, vector<1x128xf32>
    %cst = arith.constant dense<0.000000e+00> : vector<8x128xf32>
    %3 = tpu.matmul %0, %1, %cst {dimension_numbers = #tpu.dot_dimension_numbers<[1], [0], [0], [1], [0, 0, 1, 1], [], []>} : vector<8x256xbf16>, vector<256x128xbf16>, vector<8x128xf32> -> vector<8x128xf32>
    %4 = vector.broadcast %2 : vector<1x128xf32> to vector<8x128xf32>
    %5 = arith.addf %3, %4 : vector<8x128xf32>
    %cst_5 = arith.constant 0.000000e+00 : f32
    %6 = vector.broadcast %cst_5 : f32 to vector<8x128xf32>
    %7 = arith.maximumf %5, %6 : vector<8x128xf32>
    %8 = arith.truncf %7 : vector<8x128xf32> to vector<8x128xbf16>
    %c0_6 = arith.constant 0 : index
    %c0_7 = arith.constant 0 : index
    %9 = vector.load %arg4[%c0_6, %c0_7] : memref<128x128xbf16, #tpu.memory_space<vmem>>, vector<128x128xbf16>
    %c0_8 = arith.constant 0 : index
    %c0_9 = arith.constant 0 : index
    %10 = vector.load %arg5[%c0_8, %c0_9] : memref<1x128xf32, #tpu.memory_space<vmem>>, vector<1x128xf32>
    %cst_10 = arith.constant dense<0.000000e+00> : vector<8x128xf32>
    %11 = tpu.matmul %8, %9, %cst_10 {dimension_numbers = #tpu.dot_dimension_numbers<[1], [0], [0], [1], [0, 0, 1, 1], [], []>} : vector<8x128xbf16>, vector<128x128xbf16>, vector<8x128xf32> -> vector<8x128xf32>
    %12 = vector.broadcast %10 : vector<1x128xf32> to vector<8x128xf32>
    %13 = arith.addf %11, %12 : vector<8x128xf32>
    %cst_11 = arith.constant 0.000000e+00 : f32
    %14 = vector.broadcast %cst_11 : f32 to vector<8x128xf32>
    %15 = arith.maximumf %13, %14 : vector<8x128xf32>
    %16 = arith.truncf %15 : vector<8x128xf32> to vector<8x128xbf16>
    %c0_12 = arith.constant 0 : index
    %c0_13 = arith.constant 0 : index
    %17 = vector.load %arg6[%c0_12, %c0_13] : memref<128x128xbf16, #tpu.memory_space<vmem>>, vector<128x128xbf16>
    %c0_14 = arith.constant 0 : index
    %c0_15 = arith.constant 0 : index
    %18 = vector.load %arg7[%c0_14, %c0_15] : memref<1x128xf32, #tpu.memory_space<vmem>>, vector<1x128xf32>
    %cst_16 = arith.constant dense<0.000000e+00> : vector<8x128xf32>
    %19 = tpu.matmul %16, %17, %cst_16 {dimension_numbers = #tpu.dot_dimension_numbers<[1], [0], [0], [1], [0, 0, 1, 1], [], []>} : vector<8x128xbf16>, vector<128x128xbf16>, vector<8x128xf32> -> vector<8x128xf32>
    %20 = vector.broadcast %18 : vector<1x128xf32> to vector<8x128xf32>
    %21 = arith.addf %19, %20 : vector<8x128xf32>
    %c0_17 = arith.constant 0 : index
    %c0_18 = arith.constant 0 : index
    %22 = vector.load %arg8[%c0_17, %c0_18] : memref<8x128xf32, #tpu.memory_space<vmem>>, vector<8x128xf32>
    tpu.vector_store %arg8[%c0_17, %c0_18], %21 {strides = array<i32>} : memref<8x128xf32, #tpu.memory_space<vmem>>, vector<8x128xf32>,
    return
  }
  func.func @transform_0(%arg0: i32) -> (i32, i32) {
    %c0_i32 = arith.constant 0 : i32
    %c0_i32_0 = arith.constant 0 : i32
    return %arg0, %c0_i32 : i32, i32
  }
  func.func @transform_1(%arg0: i32) -> (i32, i32) {
    %c0_i32 = arith.constant 0 : i32
    %c0_i32_0 = arith.constant 0 : i32
    %c0_i32_1 = arith.constant 0 : i32
    return %c0_i32, %c0_i32_0 : i32, i32
  }
  func.func @transform_2(%arg0: i32) -> (i32, i32) {
    %c0_i32 = arith.constant 0 : i32
    %c0_i32_0 = arith.constant 0 : i32
    %c0_i32_1 = arith.constant 0 : i32
    return %c0_i32, %c0_i32_0 : i32, i32
  }
  func.func @transform_3(%arg0: i32) -> (i32, i32) {
    %c0_i32 = arith.constant 0 : i32
    %c0_i32_0 = arith.constant 0 : i32
    %c0_i32_1 = arith.constant 0 : i32
    return %c0_i32, %c0_i32_0 : i32, i32
  }
  func.func @transform_4(%arg0: i32) -> (i32, i32) {
    %c0_i32 = arith.constant 0 : i32
    %c0_i32_0 = arith.constant 0 : i32
    %c0_i32_1 = arith.constant 0 : i32
    return %c0_i32, %c0_i32_0 : i32, i32
  }
  func.func @transform_5(%arg0: i32) -> (i32, i32) {
    %c0_i32 = arith.constant 0 : i32
    %c0_i32_0 = arith.constant 0 : i32
    %c0_i32_1 = arith.constant 0 : i32
    return %c0_i32, %c0_i32_0 : i32, i32
  }
  func.func @transform_6(%arg0: i32) -> (i32, i32) {
    %c0_i32 = arith.constant 0 : i32
    %c0_i32_0 = arith.constant 0 : i32
    %c0_i32_1 = arith.constant 0 : i32
    return %c0_i32, %c0_i32_0 : i32, i32
  }
  func.func @transform_7(%arg0: i32) -> (i32, i32) {
    %c0_i32 = arith.constant 0 : i32
    %c0_i32_0 = arith.constant 0 : i32
    return %arg0, %c0_i32 : i32, i32
  }
}

</mosaic_0001>

<llo_original>
// kernel: mlp_forward.1
$region0: #{mlp_forward.1}
  #allocation0 [shape = 'u32[]', space=smem, size = 0x4, offset = 0x4, fixed_abs, tag = 'smem constant byte address 0x4 - core index']
  #allocation1 [shape = 'u32[72,128]{1,0:T(1,128)}', space=vmem, size = 0x9000, scoped, tag = 'internal scratch']
  %s0 = inlined_call_operand.vmem [shape: bf16[8,256], index: 0, kind: input, shape index: {}]
  %s1 = inlined_call_operand.vmem [shape: bf16[256,128], index: 1, kind: input, shape index: {}]
  %s2 = inlined_call_operand.vmem [shape: f32[1,128], index: 2, kind: input, shape index: {}]
  %s3 = inlined_call_operand.vmem [shape: bf16[128,128], index: 3, kind: input, shape index: {}]
  %s4 = inlined_call_operand.vmem [shape: f32[1,128], index: 4, kind: input, shape index: {}]
  %s5 = inlined_call_operand.vmem [shape: bf16[128,128], index: 5, kind: input, shape index: {}]
  %s6 = inlined_call_operand.vmem [shape: f32[1,128], index: 6, kind: input, shape index: {}]
  %s7 = inlined_call_operand.vmem [shape: f32[8,128], index: 7, kind: output, shape index: {}]
  %s8 = sld [smem:[#allocation0]]
  $region38: #{mlp_forward.1} parent=0
    _
  %s10 = ssub.s32 1, %s8
  %s11 = scalar_select 0, %s10, %s8
  // Predicated region
  $region2: #{mlp_forward.1} parent=0 // pred_check
    _
  $region3: #{mlp_forward.1} parent=0 // pred_check_branch
    %13 = sbr.rel (0) target = $region5
  $region4: #{mlp_forward.1} parent=0 // pred_region
    _
  $region5: #{mlp_forward.1} parent=0 // pred_fallthru
    _
  // Predicated region
  $region6: #{mlp_forward.1} parent=0 // pred_check
    _
  $region7: #{mlp_forward.1} parent=0 // pred_check_branch
    %15 = sbr.rel (0) target = $region9
  $region8: #{mlp_forward.1} parent=0 // pred_region
    _
  $region9: #{mlp_forward.1} parent=0 // pred_fallthru
    _
  // Predicated region
  $region10: #{mlp_forward.1} parent=0 // pred_check
    _
  $region11: #{mlp_forward.1} parent=0 // pred_check_branch
    %17 = sbr.rel (0) target = $region13
  $region12: #{mlp_forward.1} parent=0 // pred_region
    _
  $region13: #{mlp_forward.1} parent=0 // pred_fallthru
    _
  // Predicated region
  $region14: #{mlp_forward.1} parent=0 // pred_check
    _
  $region15: #{mlp_forward.1} parent=0 // pred_check_branch
    %19 = sbr.rel (0) target = $region17
  $region16: #{mlp_forward.1} parent=0 // pred_region
    _
  $region17: #{mlp_forward.1} parent=0 // pred_fallthru
    _
  // Predicated region
  $region18: #{mlp_forward.1} parent=0 // pred_check
    _
  $region19: #{mlp_forward.1} parent=0 // pred_check_branch
    %21 = sbr.rel (0) target = $region21
  $region20: #{mlp_forward.1} parent=0 // pred_region
    _
  $region21: #{mlp_forward.1} parent=0 // pred_fallthru
    _
  // Predicated region
  $region22: #{mlp_forward.1} parent=0 // pred_check
    _
  $region23: #{mlp_forward.1} parent=0 // pred_check_branch
    %23 = sbr.rel (0) target = $region25
  $region24: #{mlp_forward.1} parent=0 // pred_region
    _
  $region25: #{mlp_forward.1} parent=0 // pred_fallthru
    _
  // Predicated region
  $region26: #{mlp_forward.1} parent=0 // pred_check
    _
  $region27: #{mlp_forward.1} parent=0 // pred_check_branch
    %25 = sbr.rel (0) target = $region29
  $region28: #{mlp_forward.1} parent=0 // pred_region
    _
  $region29: #{mlp_forward.1} parent=0 // pred_fallthru
    _
  %v26 = vld [vmem:[%s0] sm:$0xff]
  %v27 = vld [vmem:[%s1] sm:$0xf]
  %v28 = vld [vmem:[%s1 + $0x4] sm:$0xf]
  %v29 = vld [vmem:[%s1 + $0x8] sm:$0xf]
  %v30 = vld [vmem:[%s1 + $0xc] sm:$0xf]
  %v31 = vld [vmem:[%s1 + $0x10] sm:$0xf]
  %v32 = vld [vmem:[%s1 + $0x14] sm:$0xf]
  %v33 = vld [vmem:[%s1 + $0x18] sm:$0xf]
  %v34 = vld [vmem:[%s1 + $0x1c] sm:$0xf]
  %v35 = vld [vmem:[%s1 + $0x20] sm:$0xf]
  %v36 = vld [vmem:[%s1 + $0x24] sm:$0xf]
  %v37 = vld [vmem:[%s1 + $0x28] sm:$0xf]
  %v38 = vld [vmem:[%s1 + $0x2c] sm:$0xf]
  %v39 = vld [vmem:[%s1 + $0x30] sm:$0xf]
  %v40 = vld [vmem:[%s1 + $0x34] sm:$0xf]
  %v41 = vld [vmem:[%s1 + $0x38] sm:$0xf]
  %v42 = vld [vmem:[%s1 + $0x3c] sm:$0xf]
  %v43 = vld [vmem:[%s1 + $0x40] sm:$0xf]
  %v44 = vld [vmem:[%s1 + $0x44] sm:$0xf]
  %v45 = vld [vmem:[%s1 + $0x48] sm:$0xf]
  %v46 = vld [vmem:[%s1 + $0x4c] sm:$0xf]
  %v47 = vld [vmem:[%s1 + $0x50] sm:$0xf]
  %v48 = vld [vmem:[%s1 + $0x54] sm:$0xf]
  %v49 = vld [vmem:[%s1 + $0x58] sm:$0xf]
  %v50 = vld [vmem:[%s1 + $0x5c] sm:$0xf]
  %v51 = vld [vmem:[%s1 + $0x60] sm:$0xf]
  %v52 = vld [vmem:[%s1 + $0x64] sm:$0xf]
  %v53 = vld [vmem:[%s1 + $0x68] sm:$0xf]
  %v54 = vld [vmem:[%s1 + $0x6c] sm:$0xf]
  %v55 = vld [vmem:[%s1 + $0x70] sm:$0xf]
  %v56 = vld [vmem:[%s1 + $0x74] sm:$0xf]
  %v57 = vld [vmem:[%s1 + $0x78] sm:$0xf]
  %v58 = vld [vmem:[%s1 + $0x7c] sm:$0xf]
  %v59 = vld [vmem:[%s2] sm:$0x1]
  %v61 = vperm.slane %v59, 0
  %v64 = vunpack.c.l.b16 %v26
  %v65 = vunpack.c.h.b16 %v26
  %v66 = vpack.c.b16 %v64, %v64
  %v67 = vpack.c.b16 %v65, %v65
  %v102 = vunpack.c.l.b16 %v27
  %v103 = vunpack.c.l.b16 %v28
  %v104 = vunpack.c.l.b16 %v29
  %v105 = vunpack.c.l.b16 %v30
  %v106 = vunpack.c.l.b16 %v31
  %v107 = vunpack.c.l.b16 %v32
  %v108 = vunpack.c.l.b16 %v33
  %v109 = vunpack.c.l.b16 %v34
  %v110 = vunpack.c.l.b16 %v35
  %v111 = vunpack.c.l.b16 %v36
  %v112 = vunpack.c.l.b16 %v37
  %v113 = vunpack.c.l.b16 %v38
  %v114 = vunpack.c.l.b16 %v39
  %v115 = vunpack.c.l.b16 %v40
  %v116 = vunpack.c.l.b16 %v41
  %v117 = vunpack.c.l.b16 %v42
  %v118 = vunpack.c.l.b16 %v43
  %v119 = vunpack.c.l.b16 %v44
  %v120 = vunpack.c.l.b16 %v45
  %v121 = vunpack.c.l.b16 %v46
  %v122 = vunpack.c.l.b16 %v47
  %v123 = vunpack.c.l.b16 %v48
  %v124 = vunpack.c.l.b16 %v49
  %v125 = vunpack.c.l.b16 %v50
  %v126 = vunpack.c.l.b16 %v51
  %v127 = vunpack.c.l.b16 %v52
  %v128 = vunpack.c.l.b16 %v53
  %v129 = vunpack.c.l.b16 %v54
  %v130 = vunpack.c.l.b16 %v55
  %v131 = vunpack.c.l.b16 %v56
  %v132 = vunpack.c.l.b16 %v57
  %v133 = vunpack.c.l.b16 %v58
  %v134 = vpack.c.b16 %v103, %v102
  %v135 = vpack.c.b16 %v105, %v104
  %v136 = vpack.c.b16 %v107, %v106
  %v137 = vpack.c.b16 %v109, %v108
  %v138 = vpack.c.b16 %v111, %v110
  %v139 = vpack.c.b16 %v113, %v112
  %v140 = vpack.c.b16 %v115, %v114
  %v141 = vpack.c.b16 %v117, %v116
  %v142 = vpack.c.b16 %v119, %v118
  %v143 = vpack.c.b16 %v121, %v120
  %v144 = vpack.c.b16 %v123, %v122
  %v145 = vpack.c.b16 %v125, %v124
  %v146 = vpack.c.b16 %v127, %v126
  %v147 = vpack.c.b16 %v129, %v128
  %v148 = vpack.c.b16 %v131, %v130
  %v149 = vpack.c.b16 %v133, %v132
  %166 = vmatpush.bf16.msra.mxu0 %v141
  %167 = vmatpush.bf16.msra.mxu0 %v140
  %168 = vmatpush.bf16.msra.mxu0 %v139
  %169 = vmatpush.bf16.msra.mxu0 %v138
  %170 = vmatpush.bf16.msra.mxu0 %v137
  %171 = vmatpush.bf16.msra.mxu0 %v136
  %172 = vmatpush.bf16.msra.mxu0 %v135
  %173 = vmatpush.bf16.msra.mxu0 %v134
  %174 = vmatmul.bf16.gmra.mxu0 %v66
  %v175 = vpop.f32.mrf.mxu0
  %v176 = vadd.f32 %v61, %v175
  %v177 = vpop.f32.mrf.mxu0
  %178 = vdwg.mxu0
  %179 = vmatpush.bf16.msra.mxu0 %v149
  %180 = vmatpush.bf16.msra.mxu0 %v148
  %181 = vmatpush.bf16.msra.mxu0 %v147
  %182 = vmatpush.bf16.msra.mxu0 %v146
  %183 = vmatpush.bf16.msra.mxu0 %v145
  %184 = vmatpush.bf16.msra.mxu0 %v144
  %185 = vmatpush.bf16.msra.mxu0 %v143
  %186 = vmatpush.bf16.msra.mxu0 %v142
  %187 = vmatmul.bf16.gmra.mxu0 %v67
  %v188 = vpop.f32.mrf.mxu0
  %v189 = vadd.f32 %v176, %v188
  %v190 = vpop.f32.mrf.mxu0
  %191 = vdwg.mxu0
  %v192 = vmax.f32 %v189, 0.0
  %v193 = vpack.c.bf16 %v192, %v192
  %v194 = vld [vmem:[%s3] sm:$0xf]
  %v195 = vld [vmem:[%s3 + $0x4] sm:$0xf]
  %v196 = vld [vmem:[%s3 + $0x8] sm:$0xf]
  %v197 = vld [vmem:[%s3 + $0xc] sm:$0xf]
  %v198 = vld [vmem:[%s3 + $0x10] sm:$0xf]
  %v199 = vld [vmem:[%s3 + $0x14] sm:$0xf]
  %v200 = vld [vmem:[%s3 + $0x18] sm:$0xf]
  %v201 = vld [vmem:[%s3 + $0x1c] sm:$0xf]
  %v202 = vld [vmem:[%s3 + $0x20] sm:$0xf]
  %v203 = vld [vmem:[%s3 + $0x24] sm:$0xf]
  %v204 = vld [vmem:[%s3 + $0x28] sm:$0xf]
  %v205 = vld [vmem:[%s3 + $0x2c] sm:$0xf]
  %v206 = vld [vmem:[%s3 + $0x30] sm:$0xf]
  %v207 = vld [vmem:[%s3 + $0x34] sm:$0xf]
  %v208 = vld [vmem:[%s3 + $0x38] sm:$0xf]
  %v209 = vld [vmem:[%s3 + $0x3c] sm:$0xf]
  %v210 = vld [vmem:[%s4] sm:$0x1]
  %v212 = vperm.slane %v210, 0
  %v230 = vunpack.c.l.b16 %v194
  %v231 = vunpack.c.l.b16 %v195
  %v232 = vunpack.c.l.b16 %v196
  %v233 = vunpack.c.l.b16 %v197
  %v234 = vunpack.c.l.b16 %v198
  %v235 = vunpack.c.l.b16 %v199
  %v236 = vunpack.c.l.b16 %v200
  %v237 = vunpack.c.l.b16 %v201
  %v238 = vunpack.c.l.b16 %v202
  %v239 = vunpack.c.l.b16 %v203
  %v240 = vunpack.c.l.b16 %v204
  %v241 = vunpack.c.l.b16 %v205
  %v242 = vunpack.c.l.b16 %v206
  %v243 = vunpack.c.l.b16 %v207
  %v244 = vunpack.c.l.b16 %v208
  %v245 = vunpack.c.l.b16 %v209
  %v246 = vpack.c.b16 %v231, %v230
  %v247 = vpack.c.b16 %v233, %v232
  %v248 = vpack.c.b16 %v235, %v234
  %v249 = vpack.c.b16 %v237, %v236
  %v250 = vpack.c.b16 %v239, %v238
  %v251 = vpack.c.b16 %v241, %v240
  %v252 = vpack.c.b16 %v243, %v242
  %v253 = vpack.c.b16 %v245, %v244
  %262 = vmatpush.bf16.msra.mxu0 %v253
  %263 = vmatpush.bf16.msra.mxu0 %v252
  %264 = vmatpush.bf16.msra.mxu0 %v251
  %265 = vmatpush.bf16.msra.mxu0 %v250
  %266 = vmatpush.bf16.msra.mxu0 %v249
  %267 = vmatpush.bf16.msra.mxu0 %v248
  %268 = vmatpush.bf16.msra.mxu0 %v247
  %269 = vmatpush.bf16.msra.mxu0 %v246
  %270 = vmatmul.bf16.gmra.mxu0 %v193
  %v271 = vpop.f32.mrf.mxu0
  %v272 = vadd.f32 %v212, %v271
  %v273 = vpop.f32.mrf.mxu0
  %274 = vdwg.mxu0
  %v275 = vmax.f32 %v272, 0.0
  %v276 = vpack.c.bf16 %v275, %v275
  %v277 = vld [vmem:[%s5] sm:$0xf]
  %v278 = vld [vmem:[%s5 + $0x4] sm:$0xf]
  %v279 = vld [vmem:[%s5 + $0x8] sm:$0xf]
  %v280 = vld [vmem:[%s5 + $0xc] sm:$0xf]
  %v281 = vld [vmem:[%s5 + $0x10] sm:$0xf]
  %v282 = vld [vmem:[%s5 + $0x14] sm:$0xf]
  %v283 = vld [vmem:[%s5 + $0x18] sm:$0xf]
  %v284 = vld [vmem:[%s5 + $0x1c] sm:$0xf]
  %v285 = vld [vmem:[%s5 + $0x20] sm:$0xf]
  %v286 = vld [vmem:[%s5 + $0x24] sm:$0xf]
  %v287 = vld [vmem:[%s5 + $0x28] sm:$0xf]
  %v288 = vld [vmem:[%s5 + $0x2c] sm:$0xf]
  %v289 = vld [vmem:[%s5 + $0x30] sm:$0xf]
  %v290 = vld [vmem:[%s5 + $0x34] sm:$0xf]
  %v291 = vld [vmem:[%s5 + $0x38] sm:$0xf]
  %v292 = vld [vmem:[%s5 + $0x3c] sm:$0xf]
  %v293 = vld [vmem:[%s6] sm:$0x1]
  %v295 = vperm.slane %v293, 0
  %v313 = vunpack.c.l.b16 %v277
  %v314 = vunpack.c.l.b16 %v278
  %v315 = vunpack.c.l.b16 %v279
  %v316 = vunpack.c.l.b16 %v280
  %v317 = vunpack.c.l.b16 %v281
  %v318 = vunpack.c.l.b16 %v282
  %v319 = vunpack.c.l.b16 %v283
  %v320 = vunpack.c.l.b16 %v284
  %v321 = vunpack.c.l.b16 %v285
  %v322 = vunpack.c.l.b16 %v286
  %v323 = vunpack.c.l.b16 %v287
  %v324 = vunpack.c.l.b16 %v288
  %v325 = vunpack.c.l.b16 %v289
  %v326 = vunpack.c.l.b16 %v290
  %v327 = vunpack.c.l.b16 %v291
  %v328 = vunpack.c.l.b16 %v292
  %v329 = vpack.c.b16 %v314, %v313
  %v330 = vpack.c.b16 %v316, %v315
  %v331 = vpack.c.b16 %v318, %v317
  %v332 = vpack.c.b16 %v320, %v319
  %v333 = vpack.c.b16 %v322, %v321
  %v334 = vpack.c.b16 %v324, %v323
  %v335 = vpack.c.b16 %v326, %v325
  %v336 = vpack.c.b16 %v328, %v327
  %345 = vmatpush.bf16.msra.mxu0 %v336
  %346 = vmatpush.bf16.msra.mxu0 %v335
  %347 = vmatpush.bf16.msra.mxu0 %v334
  %348 = vmatpush.bf16.msra.mxu0 %v333
  %349 = vmatpush.bf16.msra.mxu0 %v332
  %350 = vmatpush.bf16.msra.mxu0 %v331
  %351 = vmatpush.bf16.msra.mxu0 %v330
  %352 = vmatpush.bf16.msra.mxu0 %v329
  %353 = vmatmul.bf16.gmra.mxu0 %v276
  %v354 = vpop.f32.mrf.mxu0
  %v355 = vadd.f32 %v295, %v354
  %v356 = vpop.f32.mrf.mxu0
  %357 = vdwg.mxu0
  %358 = vst [vmem:[%s7] sm:$0xff] %v355
  // Predicated region
  $region30: #{mlp_forward.1} parent=0 // pred_check
    _
  $region31: #{mlp_forward.1} parent=0 // pred_check_branch
    %360 = sbr.rel (0) target = $region33
  $region32: #{mlp_forward.1} parent=0 // pred_region
    _
  $region33: #{mlp_forward.1} parent=0 // pred_fallthru
    _
  // Predicated region
  $region34: #{mlp_forward.1} parent=0 // pred_check
    _
  $region35: #{mlp_forward.1} parent=0 // pred_check_branch
    %362 = sbr.rel (0) target = $region37
  $region36: #{mlp_forward.1} parent=0 // pred_region
    _
  $region37: #{mlp_forward.1} parent=0 // pred_fallthru
    _

</llo_original>
